<compile_context>
chip_gen: v7x
topology: tpu7x:2x2x1
jax: 0.10.0
libtpu: 0.0.40
codegen_flags: <defaults>
</compile_context>

<pallas_src>
import functools

import jax
import jax.numpy as jnp
from jax.experimental import pallas as pl
from jax.experimental.pallas import tpu as pltpu

_LANE = 128         # lane width of a vreg
_SUBLANE = 8        # sublane count of a vreg
_TILE_B_MAX = 1024  # max batch rows per grid step (mem-bound roofline sweet spot)


def _round_up(x, m):
    return (x + m - 1) // m * m


def _choose_batch_tiling(batch):
    """Pick (tile_b, padded_batch). Splits into >=2 tiles for mid/large batches
    so the ("parallel",) axis spans both TensorCores on v7x."""
    b_small = _round_up(batch, _SUBLANE)
    if b_small <= _LANE:                       # tiny batch: single tile
        return b_small, b_small
    tile_b = min(_TILE_B_MAX, _round_up(pl.cdiv(b_small, 2), _SUBLANE))
    b_pad = _round_up(batch, tile_b)
    return tile_b, b_pad


def _actor_policy_kernel(obs_ref,
                         w_rep_ref, b_rep_ref,
                         w_h_ref, b_h_ref,
                         w_out_ref, b_out_ref,
                         state_ref, logits_ref):
    """Fused MLP forward (one batch tile): representation + actor head."""
    # obs arrives f32; bf16 cast happens here (VPU, hidden under DMA/MXU).
    obs = obs_ref[...].astype(jnp.bfloat16)          # (tb, obs_dim)

    # --- representation: Linear + ReLU -> 'state' (f32 epilogue) ---
    state = jnp.dot(obs, w_rep_ref[...],
                    preferred_element_type=jnp.float32)   # (tb, S_pad)
    state = jnp.maximum(state + b_rep_ref[...], 0.0)
    state_ref[...] = state.astype(state_ref.dtype)

    # --- actor hidden layer: Linear + ReLU ---
    h = jnp.dot(state.astype(jnp.bfloat16), w_h_ref[...],
                preferred_element_type=jnp.float32)        # (tb, H_pad)
    h = jnp.maximum(h + b_h_ref[...], 0.0)

    # --- actor output layer: Linear (no activation) -> Categorical logits ---
    logits = jnp.dot(h.astype(jnp.bfloat16), w_out_ref[...],
                     preferred_element_type=jnp.float32)   # (tb, A_pad)
    logits_ref[...] = (logits + b_out_ref[...]).astype(logits_ref.dtype)


def prepare_params(params):
    """One-time layout/precision plumbing: zero-pad feature widths to 128 lanes
    and cast weights to bf16. Call once at init; reuse the result every step."""
    w_rep, b_rep = params["w_rep"], params["b_rep"]
    w_h, b_h = params["w_h"], params["b_h"]
    w_out, b_out = params["w_out"], params["b_out"]

    obs_dim, state_dim = w_rep.shape
    hidden = w_h.shape[1]
    action_dim = w_out.shape[1]

    s_pad = _round_up(state_dim, _LANE)
    h_pad = _round_up(hidden, _LANE)
    a_pad = _round_up(action_dim, _LANE)

    prepared = {
        "w_rep": jnp.pad(w_rep, ((0, 0), (0, s_pad - state_dim))).astype(jnp.bfloat16),
        "b_rep": jnp.pad(b_rep, ((0, 0), (0, s_pad - state_dim))),            # f32
        "w_h":   jnp.pad(w_h, ((0, s_pad - state_dim), (0, h_pad - hidden))).astype(jnp.bfloat16),
        "b_h":   jnp.pad(b_h, ((0, 0), (0, h_pad - hidden))),                 # f32
        "w_out": jnp.pad(w_out, ((0, h_pad - hidden), (0, a_pad - action_dim))).astype(jnp.bfloat16),
        "b_out": jnp.pad(b_out, ((0, 0), (0, a_pad - action_dim))),           # f32
    }
    dims = {"obs_dim": obs_dim, "state_dim": state_dim, "action_dim": action_dim}
    return prepared, dims


@functools.partial(jax.jit, static_argnames=("state_dim", "action_dim", "state_dtype"))
def actor_policy_forward(obs, prepared, *, state_dim, action_dim,
                         state_dtype=jnp.float32):
    """Returns (outputs, logits) mirroring ActorPolicy.forward -> (outputs, dist)."""
    B, obs_dim = obs.shape
    s_pad = prepared["w_rep"].shape[1]
    h_pad = prepared["w_h"].shape[1]
    a_pad = prepared["w_out"].shape[1]

    tile_b, b_pad = _choose_batch_tiling(B)

    # Only per-call padding: batch rows of obs (stays f32, cast happens in-kernel).
    obs_p = jnp.pad(obs, ((0, b_pad - B), (0, 0)))

    # Batch-tiled activations; weights/biases VMEM-resident (block index fixed).
    act_spec = lambda width: pl.BlockSpec((tile_b, width), lambda i: (i, 0))
    res_spec = lambda shape: pl.BlockSpec(shape, lambda i: (0, 0))

    state_p, logits_p = pl.pallas_call(
        _actor_policy_kernel,
        grid=(b_pad // tile_b,),
        in_specs=[
            act_spec(obs_dim),
            res_spec((obs_dim, s_pad)), res_spec((1, s_pad)),
            res_spec((s_pad, h_pad)),   res_spec((1, h_pad)),
            res_spec((h_pad, a_pad)),   res_spec((1, a_pad)),
        ],
        out_specs=[
            act_spec(s_pad),
            act_spec(a_pad),
        ],
        out_shape=[
            jax.ShapeDtypeStruct((b_pad, s_pad), state_dtype),
            jax.ShapeDtypeStruct((b_pad, a_pad), jnp.float32),
        ],
        compiler_params=pltpu.CompilerParams(
            dimension_semantics=("parallel",),   # batch tiles shard over TCs (v7x)
        ),
    )(obs_p,
      prepared["w_rep"], prepared["b_rep"],
      prepared["w_h"], prepared["b_h"],
      prepared["w_out"], prepared["b_out"])

    # TODO(synk): these slices are an extra HBM pass; carry the padded buffers
    # downstream and slice at the point of use if the consumer allows it.
    state = state_p[:B, :state_dim]
    logits = logits_p[:B, :action_dim]

    outputs = {"state": state}
    return outputs, logits  # logits parameterize CategoricalDistribution


def init_params(key, obs_dim, state_dim, hidden, action_dim):
    """Deterministic synthetic weights (shapes match the nn.Linear layers)."""
    k1, k2, k3 = jax.random.split(key, 3)
    scale = 0.1
    return {
        "w_rep": scale * jax.random.normal(k1, (obs_dim, state_dim), jnp.float32),
        "b_rep": jnp.zeros((1, state_dim), jnp.float32),
        "w_h":   scale * jax.random.normal(k2, (state_dim, hidden), jnp.float32),
        "b_h":   jnp.zeros((1, hidden), jnp.float32),
        "w_out": scale * jax.random.normal(k3, (hidden, action_dim), jnp.float32),
        "b_out": jnp.zeros((1, action_dim), jnp.float32),
    }


def reference_forward(obs, p):
    """Pure-JAX f32 reference (mirrors the PyTorch nn.Sequential semantics)."""
    state = jnp.maximum(obs @ p["w_rep"] + p["b_rep"], 0.0)
    h = jnp.maximum(state @ p["w_h"] + p["b_h"], 0.0)
    logits = h @ p["w_out"] + p["b_out"]
    return state, logits


if __name__ == "__main__":
    # Small shapes: batch=8, obs_dim=16, state_dim=32, actor_hidden_size=[32], action_dim=6
    B, OBS, STATE, HID, ACT = 8, 16, 32, 32, 6

    key = jax.random.PRNGKey(0)
    k_obs, k_obs2, k_par = jax.random.split(key, 3)
    obs = jax.random.normal(k_obs, (B, OBS), jnp.float32)
    params = init_params(k_par, OBS, STATE, HID, ACT)

    # One-time parameter preparation (padding + bf16 cast hoisted out of forward).
    prepared, dims = prepare_params(params)

    outputs, logits = actor_policy_forward(
        obs, prepared, state_dim=dims["state_dim"], action_dim=dims["action_dim"])
    jax.block_until_ready((outputs["state"], logits))

    assert outputs["state"].shape == (B, STATE)
    assert logits.shape == (B, ACT)

    # Kernel runs matmuls in bf16 (MXU-native); compare against f32 reference
    # with a tolerance covering bf16 rounding (~0.4% relative).
    ref_state, ref_logits = reference_forward(obs, params)
    assert jnp.allclose(outputs["state"], ref_state, atol=2e-2, rtol=2e-2)
    assert jnp.allclose(logits, ref_logits, atol=2e-2, rtol=2e-2)

    # Second, larger batch to exercise the multi-tile (grid >= 2) parallel path.
    B2 = 200
    obs2 = jax.random.normal(k_obs2, (B2, OBS), jnp.float32)
    outputs2, logits2 = actor_policy_forward(
        obs2, prepared, state_dim=dims["state_dim"], action_dim=dims["action_dim"])
    jax.block_until_ready((outputs2["state"], logits2))

    ref_state2, ref_logits2 = reference_forward(obs2, params)
    assert outputs2["state"].shape == (B2, STATE) and logits2.shape == (B2, ACT)
    assert jnp.allclose(outputs2["state"], ref_state2, atol=2e-2, rtol=2e-2)
    assert jnp.allclose(logits2, ref_logits2, atol=2e-2, rtol=2e-2)

    print("KERNEL_OK")
</pallas_src>

<mosaic_0001>
module attributes {stable_mosaic.version = 11 : i64} {
  func.func @_actor_policy_kernel(%arg0: i32, %arg1: memref<8x16xf32, #tpu.memory_space<vmem>>, %arg2: memref<16x128xbf16, #tpu.memory_space<vmem>>, %arg3: memref<1x128xf32, #tpu.memory_space<vmem>>, %arg4: memref<128x128xbf16, #tpu.memory_space<vmem>>, %arg5: memref<1x128xf32, #tpu.memory_space<vmem>>, %arg6: memref<128x128xbf16, #tpu.memory_space<vmem>>, %arg7: memref<1x128xf32, #tpu.memory_space<vmem>>, %arg8: memref<8x128xf32, #tpu.memory_space<vmem>>, %arg9: memref<8x128xf32, #tpu.memory_space<vmem>>) attributes {dimension_semantics = [#tpu.dimension_semantics<parallel>], iteration_bounds = array<i64: 1>, scalar_prefetch = 0 : i64, scratch_operands = 0 : i64, tpu.core_type = #tpu.core_type<tc>, window_params = [{transform_indices = @transform_0, window_bounds = array<i64: 8, 16>}, {pipeline_mode = #tpu.pipeline_mode<synchronous>, transform_indices = @transform_1, window_bounds = array<i64: 16, 128>}, {pipeline_mode = #tpu.pipeline_mode<synchronous>, transform_indices = @transform_2, window_bounds = array<i64: 1, 128>}, {pipeline_mode = #tpu.pipeline_mode<synchronous>, transform_indices = @transform_3, window_bounds = array<i64: 128, 128>}, {pipeline_mode = #tpu.pipeline_mode<synchronous>, transform_indices = @transform_4, window_bounds = array<i64: 1, 128>}, {pipeline_mode = #tpu.pipeline_mode<synchronous>, transform_indices = @transform_5, window_bounds = array<i64: 128, 128>}, {pipeline_mode = #tpu.pipeline_mode<synchronous>, transform_indices = @transform_6, window_bounds = array<i64: 1, 128>}, {transform_indices = @transform_7, window_bounds = array<i64: 8, 128>}, {transform_indices = @transform_8, window_bounds = array<i64: 8, 128>}]} {
    %c0 = arith.constant 0 : index
    %c0_0 = arith.constant 0 : index
    %0 = vector.load %arg1[%c0, %c0_0] : memref<8x16xf32, #tpu.memory_space<vmem>>, vector<8x16xf32>
    %1 = arith.truncf %0 : vector<8x16xf32> to vector<8x16xbf16>
    %c0_1 = arith.constant 0 : index
    %c0_2 = arith.constant 0 : index
    %2 = vector.load %arg2[%c0_1, %c0_2] : memref<16x128xbf16, #tpu.memory_space<vmem>>, vector<16x128xbf16>
    %cst = arith.constant dense<0.000000e+00> : vector<8x128xf32>
    %3 = tpu.matmul %1, %2, %cst {dimension_numbers = #tpu.dot_dimension_numbers<[1], [0], [0], [1], [0, 0, 1, 1], [], []>} : vector<8x16xbf16>, vector<16x128xbf16>, vector<8x128xf32> -> vector<8x128xf32>
    %c0_3 = arith.constant 0 : index
    %c0_4 = arith.constant 0 : index
    %4 = vector.load %arg3[%c0_3, %c0_4] : memref<1x128xf32, #tpu.memory_space<vmem>>, vector<1x128xf32>
    %5 = vector.broadcast %4 : vector<1x128xf32> to vector<8x128xf32>
    %6 = arith.addf %3, %5 : vector<8x128xf32>
    %cst_5 = arith.constant 0.000000e+00 : f32
    %7 = vector.broadcast %cst_5 : f32 to vector<8x128xf32>
    %8 = arith.maximumf %6, %7 : vector<8x128xf32>
    %c0_6 = arith.constant 0 : index
    %c0_7 = arith.constant 0 : index
    %9 = vector.load %arg8[%c0_6, %c0_7] : memref<8x128xf32, #tpu.memory_space<vmem>>, vector<8x128xf32>
    tpu.vector_store %arg8[%c0_6, %c0_7], %8 {strides = array<i32>} : memref<8x128xf32, #tpu.memory_space<vmem>>, vector<8x128xf32>,
    %10 = arith.truncf %8 : vector<8x128xf32> to vector<8x128xbf16>
    %c0_8 = arith.constant 0 : index
    %c0_9 = arith.constant 0 : index
    %11 = vector.load %arg4[%c0_8, %c0_9] : memref<128x128xbf16, #tpu.memory_space<vmem>>, vector<128x128xbf16>
    %cst_10 = arith.constant dense<0.000000e+00> : vector<8x128xf32>
    %12 = tpu.matmul %10, %11, %cst_10 {dimension_numbers = #tpu.dot_dimension_numbers<[1], [0], [0], [1], [0, 0, 1, 1], [], []>} : vector<8x128xbf16>, vector<128x128xbf16>, vector<8x128xf32> -> vector<8x128xf32>
    %c0_11 = arith.constant 0 : index
    %c0_12 = arith.constant 0 : index
    %13 = vector.load %arg5[%c0_11, %c0_12] : memref<1x128xf32, #tpu.memory_space<vmem>>, vector<1x128xf32>
    %14 = vector.broadcast %13 : vector<1x128xf32> to vector<8x128xf32>
    %15 = arith.addf %12, %14 : vector<8x128xf32>
    %cst_13 = arith.constant 0.000000e+00 : f32
    %16 = vector.broadcast %cst_13 : f32 to vector<8x128xf32>
    %17 = arith.maximumf %15, %16 : vector<8x128xf32>
    %18 = arith.truncf %17 : vector<8x128xf32> to vector<8x128xbf16>
    %c0_14 = arith.constant 0 : index
    %c0_15 = arith.constant 0 : index
    %19 = vector.load %arg6[%c0_14, %c0_15] : memref<128x128xbf16, #tpu.memory_space<vmem>>, vector<128x128xbf16>
    %cst_16 = arith.constant dense<0.000000e+00> : vector<8x128xf32>
    %20 = tpu.matmul %18, %19, %cst_16 {dimension_numbers = #tpu.dot_dimension_numbers<[1], [0], [0], [1], [0, 0, 1, 1], [], []>} : vector<8x128xbf16>, vector<128x128xbf16>, vector<8x128xf32> -> vector<8x128xf32>
    %c0_17 = arith.constant 0 : index
    %c0_18 = arith.constant 0 : index
    %21 = vector.load %arg7[%c0_17, %c0_18] : memref<1x128xf32, #tpu.memory_space<vmem>>, vector<1x128xf32>
    %22 = vector.broadcast %21 : vector<1x128xf32> to vector<8x128xf32>
    %23 = arith.addf %20, %22 : vector<8x128xf32>
    %c0_19 = arith.constant 0 : index
    %c0_20 = arith.constant 0 : index
    %24 = vector.load %arg9[%c0_19, %c0_20] : memref<8x128xf32, #tpu.memory_space<vmem>>, vector<8x128xf32>
    tpu.vector_store %arg9[%c0_19, %c0_20], %23 {strides = array<i32>} : memref<8x128xf32, #tpu.memory_space<vmem>>, vector<8x128xf32>,
    return
  }
  func.func @transform_0(%arg0: i32) -> (i32, i32) {
    %c0_i32 = arith.constant 0 : i32
    %c0_i32_0 = arith.constant 0 : i32
    return %arg0, %c0_i32 : i32, i32
  }
  func.func @transform_1(%arg0: i32) -> (i32, i32) {
    %c0_i32 = arith.constant 0 : i32
    %c0_i32_0 = arith.constant 0 : i32
    %c0_i32_1 = arith.constant 0 : i32
    return %c0_i32, %c0_i32_0 : i32, i32
  }
  func.func @transform_2(%arg0: i32) -> (i32, i32) {
    %c0_i32 = arith.constant 0 : i32
    %c0_i32_0 = arith.constant 0 : i32
    %c0_i32_1 = arith.constant 0 : i32
    return %c0_i32, %c0_i32_0 : i32, i32
  }
  func.func @transform_3(%arg0: i32) -> (i32, i32) {
    %c0_i32 = arith.constant 0 : i32
    %c0_i32_0 = arith.constant 0 : i32
    %c0_i32_1 = arith.constant 0 : i32
    return %c0_i32, %c0_i32_0 : i32, i32
  }
  func.func @transform_4(%arg0: i32) -> (i32, i32) {
    %c0_i32 = arith.constant 0 : i32
    %c0_i32_0 = arith.constant 0 : i32
    %c0_i32_1 = arith.constant 0 : i32
    return %c0_i32, %c0_i32_0 : i32, i32
  }
  func.func @transform_5(%arg0: i32) -> (i32, i32) {
    %c0_i32 = arith.constant 0 : i32
    %c0_i32_0 = arith.constant 0 : i32
    %c0_i32_1 = arith.constant 0 : i32
    return %c0_i32, %c0_i32_0 : i32, i32
  }
  func.func @transform_6(%arg0: i32) -> (i32, i32) {
    %c0_i32 = arith.constant 0 : i32
    %c0_i32_0 = arith.constant 0 : i32
    %c0_i32_1 = arith.constant 0 : i32
    return %c0_i32, %c0_i32_0 : i32, i32
  }
  func.func @transform_7(%arg0: i32) -> (i32, i32) {
    %c0_i32 = arith.constant 0 : i32
    %c0_i32_0 = arith.constant 0 : i32
    return %arg0, %c0_i32 : i32, i32
  }
  func.func @transform_8(%arg0: i32) -> (i32, i32) {
    %c0_i32 = arith.constant 0 : i32
    %c0_i32_0 = arith.constant 0 : i32
    return %arg0, %c0_i32 : i32, i32
  }
}

</mosaic_0001>

<llo_original>
// kernel: actor_policy_forward.1
$region0: #{actor_policy_forward.1}
  #allocation0 [shape = 'u32[]', space=smem, size = 0x4, offset = 0x4, fixed_abs, tag = 'smem constant byte address 0x4 - core index']
  #allocation1 [shape = 'u32[144,128]{1,0:T(1,128)}', space=vmem, size = 0x12000, scoped, tag = 'internal scratch']
  %s0 = inlined_call_operand.hbm [shape: f32[8,16], index: 0, kind: input, shape index: {}]
  %s1 = inlined_call_operand.vmem [shape: bf16[16,128], index: 1, kind: input, shape index: {}]
  %s2 = inlined_call_operand.vmem [shape: f32[1,128], index: 2, kind: input, shape index: {}]
  %s3 = inlined_call_operand.hbm [shape: bf16[128,128], index: 3, kind: input, shape index: {}]
  %s4 = inlined_call_operand.vmem [shape: f32[1,128], index: 4, kind: input, shape index: {}]
  %s5 = inlined_call_operand.hbm [shape: bf16[128,128], index: 5, kind: input, shape index: {}]
  %s6 = inlined_call_operand.vmem [shape: f32[1,128], index: 6, kind: input, shape index: {}]
  %s7 = inlined_call_operand.hbm [shape: f32[8,128], index: 7, kind: output, shape index: {0}]
  %s8 = inlined_call_operand.hbm [shape: f32[8,128], index: 8, kind: output, shape index: {1}]
  %9 = xla_tuple %s7, %s8
  %s10 = sld [smem:[#allocation0]]
  $region58: #{actor_policy_forward.1} parent=0
    _
  %s12 = ssub.s32 1, %s10
  %s13 = scalar_select 0, %s12, %s10
  $region1: #{actor_policy_forward.1} parent=0
    #allocation2 [shape = 'u8[4096]{0}', space=vmem, size = 0x1000, scoped, tag = 'input window, operand 0, single buffered']
    #allocation3 [shape = 's32[1]{0}', space=sflag, size = 0x4, scoped, tag = 'scoped memory for actor_policy_forward.1']
    #allocation4 [shape = 's32[1]{0}', space=sflag, size = 0x4, scoped, tag = 'scoped memory for actor_policy_forward.1']
    #allocation5 [shape = 'u8[32768]{0}', space=vmem, size = 0x8000, scoped, tag = 'input window, operand 3, single buffered']
    #allocation6 [shape = 's32[1]{0}', space=sflag, size = 0x4, scoped, tag = 'scoped memory for actor_policy_forward.1']
    #allocation7 [shape = 'u8[32768]{0}', space=vmem, size = 0x8000, scoped, tag = 'input window, operand 5, single buffered']
    #allocation8 [shape = 'u8[4096]{0}', space=vmem, size = 0x1000, scoped, tag = 'output window, operand 0, single buffered']
    #allocation9 [shape = 'u8[4096]{0}', space=vmem, size = 0x1000, scoped, tag = 'output window, operand 1, single buffered']
    #allocation10 [shape = 's32[1]{0}', space=sflag, size = 0x4, scoped, tag = 'scoped memory for actor_policy_forward.1']
    %14 = vsyncpa [#allocation3], 0
    %15 = vsyncpa [#allocation6], 0
    %16 = vsyncpa [#allocation4], 0
    %17 = vsyncpa [#allocation10], 0
    // Predicated region
    $region2: #{actor_policy_forward.1} parent=1 // pred_check
      _
    $region3: #{actor_policy_forward.1} parent=1 // pred_check_branch
      %19 = sbr.rel (0) target = $region5
    $region4: #{actor_policy_forward.1} parent=1 // pred_region
      %s21 = ssub.s32 128, 128
      %22 = vsyncadd [#allocation3], %s21
      %s24 = sshll.u32 [#allocation2], 4
      %s25 = int_to_ptr.vmem [resolvable:$true] %s24
      %27 = dma.hbm_to_vmem [thread:$0]  %s0, 128, %s25, [#allocation3]
    $region5: #{actor_policy_forward.1} parent=1 // pred_fallthru
      _
    // Predicated region
    $region6: #{actor_policy_forward.1} parent=1 // pred_check
      _
    $region7: #{actor_policy_forward.1} parent=1 // pred_check_branch
      %29 = sbr.rel (0) target = $region9
    $region8: #{actor_policy_forward.1} parent=1 // pred_region
      _
    $region9: #{actor_policy_forward.1} parent=1 // pred_fallthru
      _
    // Predicated region
    $region10: #{actor_policy_forward.1} parent=1 // pred_check
      _
    $region11: #{actor_policy_forward.1} parent=1 // pred_check_branch
      %31 = sbr.rel (0) target = $region13
    $region12: #{actor_policy_forward.1} parent=1 // pred_region
      _
    $region13: #{actor_policy_forward.1} parent=1 // pred_fallthru
      _
    // Predicated region
    $region14: #{actor_policy_forward.1} parent=1 // pred_check
      _
    $region15: #{actor_policy_forward.1} parent=1 // pred_check_branch
      %33 = sbr.rel (0) target = $region17
    $region16: #{actor_policy_forward.1} parent=1 // pred_region
      %s35 = ssub.s32 1024, 1024
      %36 = vsyncadd [#allocation6], %s35
      %s37 = sshll.u32 [#allocation5], 4
      %s38 = int_to_ptr.vmem [resolvable:$true] %s37
      %43 = dma.hbm_to_vmem [thread:$0]  %s3, 1024, %s38, [#allocation6], 64, 64, 4
    $region17: #{actor_policy_forward.1} parent=1 // pred_fallthru
      _
    // Predicated region
    $region18: #{actor_policy_forward.1} parent=1 // pred_check
      _
    $region19: #{actor_policy_forward.1} parent=1 // pred_check_branch
      %45 = sbr.rel (0) target = $region21
    $region20: #{actor_policy_forward.1} parent=1 // pred_region
      _
    $region21: #{actor_policy_forward.1} parent=1 // pred_fallthru
      _
    // Predicated region
    $region22: #{actor_policy_forward.1} parent=1 // pred_check
      _
    $region23: #{actor_policy_forward.1} parent=1 // pred_check_branch
      %47 = sbr.rel (0) target = $region25
    $region24: #{actor_policy_forward.1} parent=1 // pred_region
      %s49 = ssub.s32 1024, 1024
      %50 = vsyncadd [#allocation6], %s49
      %s51 = sshll.u32 [#allocation7], 4
      %s52 = int_to_ptr.vmem [resolvable:$true] %s51
      %57 = dma.hbm_to_vmem [thread:$0]  %s5, 1024, %s52, [#allocation6], 64, 64, 4
    $region25: #{actor_policy_forward.1} parent=1 // pred_fallthru
      _
    // Predicated region
    $region26: #{actor_policy_forward.1} parent=1 // pred_check
      _
    $region27: #{actor_policy_forward.1} parent=1 // pred_check_branch
      %59 = sbr.rel (0) target = $region29
    $region28: #{actor_policy_forward.1} parent=1 // pred_region
      _
    $region29: #{actor_policy_forward.1} parent=1 // pred_fallthru
      _
    // Predicated region
    $region30: #{actor_policy_forward.1} parent=1 // pred_check
      _
    $region31: #{actor_policy_forward.1} parent=1 // pred_check_branch
      %61 = sbr.rel (0) target = $region33
    $region32: #{actor_policy_forward.1} parent=1 // pred_region
      %62 = dma.done [#allocation3], 128
    $region33: #{actor_policy_forward.1} parent=1 // pred_fallthru
      _
    // Predicated region
    $region34: #{actor_policy_forward.1} parent=1 // pred_check
      _
    $region35: #{actor_policy_forward.1} parent=1 // pred_check_branch
      %64 = sbr.rel (0) target = $region37
    $region36: #{actor_policy_forward.1} parent=1 // pred_region
      %65 = dma.done [#allocation6], 1024
    $region37: #{actor_policy_forward.1} parent=1 // pred_fallthru
      _
    // Predicated region
    $region38: #{actor_policy_forward.1} parent=1 // pred_check
      _
    $region39: #{actor_policy_forward.1} parent=1 // pred_check_branch
      %67 = sbr.rel (0) target = $region41
    $region40: #{actor_policy_forward.1} parent=1 // pred_region
      %68 = dma.done [#allocation6], 1024
    $region41: #{actor_policy_forward.1} parent=1 // pred_fallthru
      _
    %v70 = vld [vmem:[#allocation2] sm:$0xff]
    %v71 = vpack.c.bf16 %v70, %v70
    %v72 = vld [vmem:[%s1] sm:$0xf]
    %v73 = vld [vmem:[%s1 + $0x4] sm:$0xf]
    %v74 = vld [vmem:[%s2] sm:$0x1]
    %v76 = vlaneseq
    %v77 = vshrl.u32 %v76, 7
    %v78 = vsub.s32 0, %v77
    %v79 = vrot.slane %v74, %v78
    %v83 = vunpack.c.l.b16 %v72
    %v84 = vunpack.c.l.b16 %v73
    %v85 = vpack.c.b16 %v84, %v83
    %vm87 = vcmask 130048
    %v89 = vsel %vm87, %v71, 0
    %91 = vmatprep.subr.bf16.mxu0 0
    %92 = vmatpush1.bf16.msra.mxu0 %v85
    %93 = vmatprep.subr.bf16.mxu0 0
    %94 = vmatpush1.bf16.msra.mxu0 0
    %95 = vmatprep.subr.bf16.mxu0 0
    %96 = vmatpush1.bf16.msra.mxu0 0
    %97 = vmatprep.subr.bf16.mxu0 0
    %98 = vmatpush1.bf16.msra.mxu0 0
    %99 = vmatprep.subr.bf16.mxu0 0
    %100 = vmatpush1.bf16.msra.mxu0 0
    %101 = vmatprep.subr.bf16.mxu0 0
    %102 = vmatpush1.bf16.msra.mxu0 0
    %103 = vmatprep.subr.bf16.mxu0 0
    %104 = vmatpush1.bf16.msra.mxu0 0
    %105 = vmatprep.subr.bf16.mxu0 0
    %106 = vmatpush1.bf16.msra.mxu0 0
    %107 = vmatprep.subr.bf16.mxu0 0
    %108 = vmatpush1.bf16.msra.mxu0 0
    %109 = vmatprep.subr.bf16.mxu0 0
    %110 = vmatpush1.bf16.msra.mxu0 0
    %111 = vmatprep.subr.bf16.mxu0 0
    %112 = vmatpush1.bf16.msra.mxu0 0
    %113 = vmatprep.subr.bf16.mxu0 0
    %114 = vmatpush1.bf16.msra.mxu0 0
    %115 = vmatprep.subr.bf16.mxu0 0
    %116 = vmatpush1.bf16.msra.mxu0 0
    %117 = vmatprep.subr.bf16.mxu0 0
    %118 = vmatpush1.bf16.msra.mxu0 0
    %119 = vmatprep.subr.bf16.mxu0 0
    %120 = vmatpush1.bf16.msra.mxu0 0
    %121 = vmatprep.subr.bf16.mxu0 0
    %122 = vmatpush1.bf16.msra.mxu0 0
    %123 = vmatprep.mubr.bf16.mxu0 0
    %124 = vmatmul.mubr.bf16.gmra.mrb[0].mxu0 %v89
    %v125 = vpop.f32.mrb[0].mxu0
    %v126 = vadd.f32 %v79, %v125
    %v127 = vpop.f32.mrb[0].mxu0
    %v128 = vpop.f32.mrb[0].mxu0
    %v129 = vpop.f32.mrb[0].mxu0
    %130 = vdwg.mxu0
    %v131 = vmax.f32 %v126, 0.0
    %132 = vst [vmem:[#allocation8] sm:$0xff] %v131
    %v133 = vpack.c.bf16 %v131, %v131
    %v134 = vld [vmem:[#allocation5] sm:$0xf]
    %v135 = vld [vmem:[#allocation5 + $0x4] sm:$0xf]
    %v136 = vld [vmem:[#allocation5 + $0x8] sm:$0xf]
    %v137 = vld [vmem:[#allocation5 + $0xc] sm:$0xf]
    %v138 = vld [vmem:[#allocation5 + $0x10] sm:$0xf]
    %v139 = vld [vmem:[#allocation5 + $0x14] sm:$0xf]
    %v140 = vld [vmem:[#allocation5 + $0x18] sm:$0xf]
    %v141 = vld [vmem:[#allocation5 + $0x1c] sm:$0xf]
    %v142 = vld [vmem:[#allocation5 + $0x20] sm:$0xf]
    %v143 = vld [vmem:[#allocation5 + $0x24] sm:$0xf]
    %v144 = vld [vmem:[#allocation5 + $0x28] sm:$0xf]
    %v145 = vld [vmem:[#allocation5 + $0x2c] sm:$0xf]
    %v146 = vld [vmem:[#allocation5 + $0x30] sm:$0xf]
    %v147 = vld [vmem:[#allocation5 + $0x34] sm:$0xf]
    %v148 = vld [vmem:[#allocation5 + $0x38] sm:$0xf]
    %v149 = vld [vmem:[#allocation5 + $0x3c] sm:$0xf]
    %v150 = vld [vmem:[%s4] sm:$0x1]
    %v152 = vlaneseq
    %v153 = vshrl.u32 %v152, 7
    %v154 = vsub.s32 0, %v153
    %v155 = vrot.slane %v150, %v154
    %v173 = vunpack.c.l.b16 %v134
    %v174 = vunpack.c.l.b16 %v135
    %v175 = vunpack.c.l.b16 %v136
    %v176 = vunpack.c.l.b16 %v137
    %v177 = vunpack.c.l.b16 %v138
    %v178 = vunpack.c.l.b16 %v139
    %v179 = vunpack.c.l.b16 %v140
    %v180 = vunpack.c.l.b16 %v141
    %v181 = vunpack.c.l.b16 %v142
    %v182 = vunpack.c.l.b16 %v143
    %v183 = vunpack.c.l.b16 %v144
    %v184 = vunpack.c.l.b16 %v145
    %v185 = vunpack.c.l.b16 %v146
    %v186 = vunpack.c.l.b16 %v147
    %v187 = vunpack.c.l.b16 %v148
    %v188 = vunpack.c.l.b16 %v149
    %v189 = vpack.c.b16 %v174, %v173
    %v190 = vpack.c.b16 %v176, %v175
    %v191 = vpack.c.b16 %v178, %v177
    %v192 = vpack.c.b16 %v180, %v179
    %v193 = vpack.c.b16 %v182, %v181
    %v194 = vpack.c.b16 %v184, %v183
    %v195 = vpack.c.b16 %v186, %v185
    %v196 = vpack.c.b16 %v188, %v187
    %205 = vmatprep.subr.bf16.mxu0 0
    %206 = vmatpush1.bf16.msra.mxu0 %v189
    %207 = vmatprep.subr.bf16.mxu0 0
    %208 = vmatpush1.bf16.msra.mxu0 %v190
    %209 = vmatprep.subr.bf16.mxu0 0
    %210 = vmatpush1.bf16.msra.mxu0 %v191
    %211 = vmatprep.subr.bf16.mxu0 0
    %212 = vmatpush1.bf16.msra.mxu0 %v192
    %213 = vmatprep.subr.bf16.mxu0 0
    %214 = vmatpush1.bf16.msra.mxu0 %v193
    %215 = vmatprep.subr.bf16.mxu0 0
    %216 = vmatpush1.bf16.msra.mxu0 %v194
    %217 = vmatprep.subr.bf16.mxu0 0
    %218 = vmatpush1.bf16.msra.mxu0 %v195
    %219 = vmatprep.subr.bf16.mxu0 0
    %220 = vmatpush1.bf16.msra.mxu0 %v196
    %221 = vmatprep.subr.bf16.mxu0 0
    %222 = vmatpush1.bf16.msra.mxu0 0
    %223 = vmatprep.subr.bf16.mxu0 0
    %224 = vmatpush1.bf16.msra.mxu0 0
    %225 = vmatprep.subr.bf16.mxu0 0
    %226 = vmatpush1.bf16.msra.mxu0 0
    %227 = vmatprep.subr.bf16.mxu0 0
    %228 = vmatpush1.bf16.msra.mxu0 0
    %229 = vmatprep.subr.bf16.mxu0 0
    %230 = vmatpush1.bf16.msra.mxu0 0
    %231 = vmatprep.subr.bf16.mxu0 0
    %232 = vmatpush1.bf16.msra.mxu0 0
    %233 = vmatprep.subr.bf16.mxu0 0
    %234 = vmatpush1.bf16.msra.mxu0 0
    %235 = vmatprep.subr.bf16.mxu0 0
    %236 = vmatpush1.bf16.msra.mxu0 0
    %237 = vmatprep.mubr.bf16.mxu0 0
    %238 = vmatmul.mubr.bf16.gmra.mrb[0].mxu0 %v133
    %v239 = vpop.f32.mrb[0].mxu0
    %v240 = vadd.f32 %v155, %v239
    %v241 = vpop.f32.mrb[0].mxu0
    %v242 = vpop.f32.mrb[0].mxu0
    %v243 = vpop.f32.mrb[0].mxu0
    %244 = vdwg.mxu0
    %v245 = vmax.f32 %v240, 0.0
    %v246 = vpack.c.bf16 %v245, %v245
    %v247 = vld [vmem:[#allocation7] sm:$0xf]
    %v248 = vld [vmem:[#allocation7 + $0x4] sm:$0xf]
    %v249 = vld [vmem:[#allocation7 + $0x8] sm:$0xf]
    %v250 = vld [vmem:[#allocation7 + $0xc] sm:$0xf]
    %v251 = vld [vmem:[#allocation7 + $0x10] sm:$0xf]
    %v252 = vld [vmem:[#allocation7 + $0x14] sm:$0xf]
    %v253 = vld [vmem:[#allocation7 + $0x18] sm:$0xf]
    %v254 = vld [vmem:[#allocation7 + $0x1c] sm:$0xf]
    %v255 = vld [vmem:[#allocation7 + $0x20] sm:$0xf]
    %v256 = vld [vmem:[#allocation7 + $0x24] sm:$0xf]
    %v257 = vld [vmem:[#allocation7 + $0x28] sm:$0xf]
    %v258 = vld [vmem:[#allocation7 + $0x2c] sm:$0xf]
    %v259 = vld [vmem:[#allocation7 + $0x30] sm:$0xf]
    %v260 = vld [vmem:[#allocation7 + $0x34] sm:$0xf]
    %v261 = vld [vmem:[#allocation7 + $0x38] sm:$0xf]
    %v262 = vld [vmem:[#allocation7 + $0x3c] sm:$0xf]
    %v263 = vld [vmem:[%s6] sm:$0x1]
    %v265 = vlaneseq
    %v266 = vshrl.u32 %v265, 7
    %v267 = vsub.s32 0, %v266
    %v268 = vrot.slane %v263, %v267
    %v286 = vunpack.c.l.b16 %v247
    %v287 = vunpack.c.l.b16 %v248
    %v288 = vunpack.c.l.b16 %v249
    %v289 = vunpack.c.l.b16 %v250
    %v290 = vunpack.c.l.b16 %v251
    %v291 = vunpack.c.l.b16 %v252
    %v292 = vunpack.c.l.b16 %v253
    %v293 = vunpack.c.l.b16 %v254
    %v294 = vunpack.c.l.b16 %v255
    %v295 = vunpack.c.l.b16 %v256
    %v296 = vunpack.c.l.b16 %v257
    %v297 = vunpack.c.l.b16 %v258
    %v298 = vunpack.c.l.b16 %v259
    %v299 = vunpack.c.l.b16 %v260
    %v300 = vunpack.c.l.b16 %v261
    %v301 = vunpack.c.l.b16 %v262
    %v302 = vpack.c.b16 %v287, %v286
    %v303 = vpack.c.b16 %v289, %v288
    %v304 = vpack.c.b16 %v291, %v290
    %v305 = vpack.c.b16 %v293, %v292
    %v306 = vpack.c.b16 %v295, %v294
    %v307 = vpack.c.b16 %v297, %v296
    %v308 = vpack.c.b16 %v299, %v298
    %v309 = vpack.c.b16 %v301, %v300
    %318 = vmatprep.subr.bf16.mxu0 0
    %319 = vmatpush1.bf16.msra.mxu0 %v302
    %320 = vmatprep.subr.bf16.mxu0 0
    %321 = vmatpush1.bf16.msra.mxu0 %v303
    %322 = vmatprep.subr.bf16.mxu0 0
    %323 = vmatpush1.bf16.msra.mxu0 %v304
    %324 = vmatprep.subr.bf16.mxu0 0
    %325 = vmatpush1.bf16.msra.mxu0 %v305
    %326 = vmatprep.subr.bf16.mxu0 0
    %327 = vmatpush1.bf16.msra.mxu0 %v306
    %328 = vmatprep.subr.bf16.mxu0 0
    %329 = vmatpush1.bf16.msra.mxu0 %v307
    %330 = vmatprep.subr.bf16.mxu0 0
    %331 = vmatpush1.bf16.msra.mxu0 %v308
    %332 = vmatprep.subr.bf16.mxu0 0
    %333 = vmatpush1.bf16.msra.mxu0 %v309
    %334 = vmatprep.subr.bf16.mxu0 0
    %335 = vmatpush1.bf16.msra.mxu0 0
    %336 = vmatprep.subr.bf16.mxu0 0
    %337 = vmatpush1.bf16.msra.mxu0 0
    %338 = vmatprep.subr.bf16.mxu0 0
    %339 = vmatpush1.bf16.msra.mxu0 0
    %340 = vmatprep.subr.bf16.mxu0 0
    %341 = vmatpush1.bf16.msra.mxu0 0
    %342 = vmatprep.subr.bf16.mxu0 0
    %343 = vmatpush1.bf16.msra.mxu0 0
    %344 = vmatprep.subr.bf16.mxu0 0
    %345 = vmatpush1.bf16.msra.mxu0 0
    %346 = vmatprep.subr.bf16.mxu0 0
    %347 = vmatpush1.bf16.msra.mxu0 0
    %348 = vmatprep.subr.bf16.mxu0 0
    %349 = vmatpush1.bf16.msra.mxu0 0
    %350 = vmatprep.mubr.bf16.mxu0 0
    %351 = vmatmul.mubr.bf16.gmra.mrb[0].mxu0 %v246
    %v352 = vpop.f32.mrb[0].mxu0
    %v353 = vadd.f32 %v268, %v352
    %v354 = vpop.f32.mrb[0].mxu0
    %v355 = vpop.f32.mrb[0].mxu0
    %v356 = vpop.f32.mrb[0].mxu0
    %357 = vdwg.mxu0
    %358 = vst [vmem:[#allocation9] sm:$0xff] %v353
    // Predicated region
    $region42: #{actor_policy_forward.1} parent=1 // pred_check
      _
    $region43: #{actor_policy_forward.1} parent=1 // pred_check_branch
      %360 = sbr.rel (0) target = $region45
    $region44: #{actor_policy_forward.1} parent=1 // pred_region
      %s362 = ssub.s32 128, 128
      %363 = vsyncadd [#allocation4], %s362
      %s365 = sshll.u32 [#allocation8], 4
      %s366 = int_to_ptr.vmem [resolvable:$true] %s365
      %368 = dma.vmem_to_hbm [thread:$0]  %s366, 128, %s7, [#allocation4]
    $region45: #{actor_policy_forward.1} parent=1 // pred_fallthru
      _
    // Predicated region
    $region46: #{actor_policy_forward.1} parent=1 // pred_check
      _
    $region47: #{actor_policy_forward.1} parent=1 // pred_check_branch
      %370 = sbr.rel (0) target = $region49
    $region48: #{actor_policy_forward.1} parent=1 // pred_region
      %s372 = ssub.s32 128, 128
      %373 = vsyncadd [#allocation10], %s372
      %s375 = sshll.u32 [#allocation9], 4
      %s376 = int_to_ptr.vmem [resolvable:$true] %s375
      %378 = dma.vmem_to_hbm [thread:$0]  %s376, 128, %s8, [#allocation10]
    $region49: #{actor_policy_forward.1} parent=1 // pred_fallthru
      _
    // Predicated region
    $region50: #{actor_policy_forward.1} parent=1 // pred_check
      _
    $region51: #{actor_policy_forward.1} parent=1 // pred_check_branch
      %380 = sbr.rel (0) target = $region53
    $region52: #{actor_policy_forward.1} parent=1 // pred_region
      %381 = dma.done [#allocation4], 128
    $region53: #{actor_policy_forward.1} parent=1 // pred_fallthru
      _
    // Predicated region
    $region54: #{actor_policy_forward.1} parent=1 // pred_check
      _
    $region55: #{actor_policy_forward.1} parent=1 // pred_check_branch
      %383 = sbr.rel (0) target = $region57
    $region56: #{actor_policy_forward.1} parent=1 // pred_region
      %384 = dma.done [#allocation10], 128
    $region57: #{actor_policy_forward.1} parent=1 // pred_fallthru
      _
    %385 = vsyncpa [#allocation3], 1
    %386 = vsyncpa [#allocation6], 1
    %387 = vsyncpa [#allocation4], 1
    %388 = vsyncpa [#allocation10], 1

</llo_original>
